<compile_context>
chip_gen: v6e
topology: v6e:2x2x1
jax: 0.10.0
libtpu: 0.0.40
codegen_flags: <defaults>
</compile_context>

<pallas_src>
import functools

import jax
import jax.numpy as jnp
from jax.experimental import pallas as pl
from jax.experimental.pallas import tpu as pltpu


def _round_up(x, m):
    return (x + m - 1) // m * m


def _radius_topk_kernel(pos_ref, post_ref, brow_ref, bcol_ref,
                        idx_ref, dist_ref, *, tm, n_cols, k, cutoff_sq):
    """One row tile: emit the first-K valid neighbours of each query atom.

    pos_ref  : (tm, 3)      f32 row-tile of positions (query atoms)
    post_ref : (3, n_cols)  f32 transposed positions of all candidate atoms
    brow_ref : (tm, 1)      i32 molecule ids of query atoms
    bcol_ref : (1, n_cols)  i32 molecule ids of candidate atoms
    idx_ref  : (tm, k)      i32 neighbour column indices, -1 at unused slots
    dist_ref : (tm, k)      f32 ||pos_i - pos_j||, 0 at unused slots
    """
    p = pos_ref[...]                      # (tm, 3)
    pt = post_ref[...]                    # (3, C)

    # Exact squared distances, coordinate-wise broadcast (matches
    # (pos[row] - pos[col]).norm with no |x|^2 cancellation); first coordinate
    # initialises the accumulator directly (no zeros materialisation).
    diff = p[:, 0:1] - pt[0:1, :]
    d2 = diff * diff
    for c in (1, 2):
        diff = p[:, c:c + 1] - pt[c:c + 1, :]
        d2 = d2 + diff * diff

    # Validity: same molecule, within cutoff (squared compare; sqrt deferred to
    # the K selected edges), not a self loop.  Only small (tm,1)/(1,C) iotas.
    same_mol = brow_ref[...] == bcol_ref[...]                       # (tm,1)==(1,C)
    within = d2 <= jnp.float32(cutoff_sq)
    i0 = pl.program_id(0) * tm
    row_ids = i0 + jax.lax.broadcasted_iota(jnp.int32, (tm, 1), 0)  # (tm, 1)
    col_ids = jax.lax.broadcasted_iota(jnp.int32, (1, n_cols), 1)   # (1, C)
    valid = same_mol & within & (row_ids != col_ids)                # (tm, C)

    # Selection key: column index where valid, C (sentinel) otherwise.  The K
    # smallest keys per row are the first K in-radius neighbours by column
    # index.  Keys are unique per row, so each extracted minimum is unique.
    big = jnp.float32(n_cols)
    key = jnp.where(valid, col_ids.astype(jnp.float32), big)        # (tm, C)

    for s in range(k):                                   # static unroll over K
        m = jnp.min(key, axis=1, keepdims=True)                     # (tm, 1)
        found = m < big                                              # (tm, 1)
        hit = (key == m) & found                                     # (tm, C)
        d2_sel = jnp.sum(jnp.where(hit, d2, 0.0), axis=1, keepdims=True)
        idx_ref[:, s:s + 1] = jnp.where(found, m, -1.0).astype(jnp.int32)
        dist_ref[:, s:s + 1] = jnp.where(found, jnp.sqrt(d2_sel), 0.0)
        if s + 1 < k:
            key = jnp.where(hit, big, key)               # drop the selected col


def radius_topk(pos, batch, cutoff, k):
    """Pallas call: (n_pad_r, k) neighbour indices (-1 pad) + distances (0 pad)."""
    n = pos.shape[0]
    pos = pos.astype(jnp.float32)
    batch = batch.astype(jnp.int32)

    n_pad_c = _round_up(n, 128)     # lane padding only
    n_pad_r = _round_up(n, 8)       # sublane padding only

    # (tm, C) f32 intermediates (d2, key, per-step temporaries) live in VMEM;
    # keep ~8 of them under ~16 MiB so we stay well inside the 32 MiB scoped
    # VMEM default on v5e/v6e and v7x's smaller 64 MiB VMEM.
    tm_cap = max(8, ((16 * 1024 * 1024) // (8 * 4 * n_pad_c)) // 8 * 8)
    tm = 8
    for cand in (256, 128, 64, 32, 16):
        if cand <= tm_cap and n_pad_r % cand == 0:
            tm = cand
            break

    def pad_pos(n_pad):
        if n_pad == n:
            return pos
        return jnp.concatenate([pos, jnp.zeros((n_pad - n, 3), jnp.float32)], 0)

    def pad_batch(n_pad):
        if n_pad == n:
            return batch
        # Unique negative ids: padded atoms never share a molecule with anyone
        # (the self pair pad_i/pad_i is removed by the self-loop check).
        pad_ids = -(jnp.arange(n, n_pad, dtype=jnp.int32) + 1)
        return jnp.concatenate([batch, pad_ids], 0)

    pos_r = pad_pos(n_pad_r)                         # (n_pad_r, 3)
    pos_ct = pad_pos(n_pad_c).T                      # (3, n_pad_c)
    brow = pad_batch(n_pad_r).reshape(n_pad_r, 1)    # (n_pad_r, 1)
    bcol = pad_batch(n_pad_c).reshape(1, n_pad_c)    # (1, n_pad_c)

    kernel = functools.partial(_radius_topk_kernel, tm=tm, n_cols=n_pad_c,
                               k=k, cutoff_sq=float(cutoff) ** 2)
    return pl.pallas_call(
        kernel,
        out_shape=(jax.ShapeDtypeStruct((n_pad_r, k), jnp.int32),
                   jax.ShapeDtypeStruct((n_pad_r, k), jnp.float32)),
        grid=(n_pad_r // tm,),
        in_specs=[pl.BlockSpec((tm, 3), lambda i: (i, 0)),        # row positions
                  pl.BlockSpec((3, n_pad_c), lambda i: (0, 0)),   # all candidates
                  pl.BlockSpec((tm, 1), lambda i: (i, 0)),        # row batch ids
                  pl.BlockSpec((1, n_pad_c), lambda i: (0, 0))],  # col batch ids
        out_specs=(pl.BlockSpec((tm, k), lambda i: (i, 0)),
                   pl.BlockSpec((tm, k), lambda i: (i, 0))),
        compiler_params=pltpu.CompilerParams(
            dimension_semantics=("parallel",)),
    )(pos_r, pos_ct, brow, bcol)


def radius_interaction_graph(pos, batch, cutoff=10.0, max_num_neighbors=32):
    """JAX/Pallas equivalent of RadiusInteractionGraph.forward.

    Returns a *padded* edge list (JAX needs static shapes):
      edge_index : (2, N*K) int32, row 0 = source j, row 1 = target i
                   (flow='source_to_target' like torch_geometric.radius_graph),
                   padded slots are -1.
      edge_weight: (N*K,) float32, ||pos[row] - pos[col]||, 0 at padded slots.
      edge_valid : (N*K,) bool, which slots hold real edges.
    """
    # TODO(synk): torch returns a dynamically-sized, compacted int64 edge list;
    # with static shapes we return a padded list + validity mask instead.
    n = pos.shape[0]
    k = int(min(max_num_neighbors, n))

    nbr_idx, nbr_dist = radius_topk(pos, batch, cutoff, k)   # fused Pallas kernel
    nbr_idx = nbr_idx[:n]                                     # drop padded rows
    nbr_dist = nbr_dist[:n]
    slot_valid = nbr_idx >= 0                                 # (n, k)

    tgt = jnp.where(slot_valid, jnp.arange(n, dtype=jnp.int32)[:, None], -1)
    edge_index = jnp.stack([nbr_idx.reshape(-1), tgt.reshape(-1)], axis=0)
    return edge_index, nbr_dist.reshape(-1), slot_valid.reshape(-1)


def _reference_graph(pos, batch, cutoff, k):
    """Pure-JAX reference: dense distances + first-k-by-column-index selection."""
    n = pos.shape[0]
    diff = pos[:, None, :] - pos[None, :, :]
    dist = jnp.sqrt(jnp.sum(diff * diff, axis=-1))
    mask = ((batch[:, None] == batch[None, :]) & (dist <= cutoff)
            & (~jnp.eye(n, dtype=bool)))
    col = jnp.arange(n, dtype=jnp.int32)[None, :]
    sort_key = jnp.where(mask, col, col + n)
    neg, order = jax.lax.top_k(-sort_key, k)
    valid = (-neg) < n
    src = jnp.where(valid, order.astype(jnp.int32), -1)
    tgt = jnp.where(valid, jnp.arange(n, dtype=jnp.int32)[:, None], -1)
    ew = jnp.where(valid, jnp.take_along_axis(dist, order, axis=1), 0.0)
    return (jnp.stack([src.reshape(-1), tgt.reshape(-1)], axis=0),
            ew.reshape(-1), valid.reshape(-1))


if __name__ == "__main__":
    def run_case(seed, mol_sizes, cutoff, max_num_neighbors):
        n = int(sum(mol_sizes))
        key = jax.random.PRNGKey(seed)
        pos = jax.random.uniform(key, (n, 3), jnp.float32,
                                 minval=0.0, maxval=4.0)
        batch = jnp.concatenate(
            [jnp.full((s,), i, jnp.int32) for i, s in enumerate(mol_sizes)])

        graph_fn = jax.jit(functools.partial(
            radius_interaction_graph, cutoff=cutoff,
            max_num_neighbors=max_num_neighbors))
        edge_index, edge_weight, edge_valid = jax.block_until_ready(
            graph_fn(pos, batch))

        # ---- sanity checks against a pure-JAX reference ---------------------
        k = int(min(max_num_neighbors, n))
        ref_ei, ref_ew, ref_ev = _reference_graph(pos, batch, cutoff, k)
        assert bool(jnp.all(edge_valid == ref_ev))
        assert bool(jnp.all(edge_index == ref_ei))
        assert jnp.allclose(edge_weight, ref_ew, atol=1e-5)

        # Edge weights consistent with positions for the selected edges.
        src, tgt = edge_index
        ew_chk = jnp.where(
            edge_valid,
            jnp.linalg.norm(pos[jnp.maximum(src, 0)] - pos[jnp.maximum(tgt, 0)],
                            axis=-1),
            0.0)
        assert jnp.allclose(edge_weight, ew_chk, atol=1e-5)

    # Small deterministic cases: the second one exercises padded rows/columns
    # and a multi-step row grid.
    run_case(seed=0, mol_sizes=(16, 16), cutoff=2.0, max_num_neighbors=8)
    run_case(seed=1, mol_sizes=(20, 17, 13), cutoff=1.5, max_num_neighbors=6)

    print("KERNEL_OK")
</pallas_src>

<mosaic_0001>
module attributes {stable_mosaic.version = 11 : i64} {
  func.func @_radius_topk_kernel(%arg0: i32, %arg1: memref<32x3xf32, #tpu.memory_space<vmem>>, %arg2: memref<3x128xf32, #tpu.memory_space<vmem>>, %arg3: memref<32x1xi32, #tpu.memory_space<vmem>>, %arg4: memref<1x128xi32, #tpu.memory_space<vmem>>, %arg5: memref<32x8xi32, #tpu.memory_space<vmem>>, %arg6: memref<32x8xf32, #tpu.memory_space<vmem>>) attributes {dimension_semantics = [#tpu.dimension_semantics<parallel>], iteration_bounds = array<i64: 1>, scalar_prefetch = 0 : i64, scratch_operands = 0 : i64, tpu.core_type = #tpu.core_type<tc>, window_params = [{transform_indices = @transform_0, window_bounds = array<i64: 32, 3>}, {pipeline_mode = #tpu.pipeline_mode<synchronous>, transform_indices = @transform_1, window_bounds = array<i64: 3, 128>}, {transform_indices = @transform_2, window_bounds = array<i64: 32, 1>}, {pipeline_mode = #tpu.pipeline_mode<synchronous>, transform_indices = @transform_3, window_bounds = array<i64: 1, 128>}, {transform_indices = @transform_4, window_bounds = array<i64: 32, 8>}, {transform_indices = @transform_5, window_bounds = array<i64: 32, 8>}]} {
    %c0 = arith.constant 0 : index
    %c0_0 = arith.constant 0 : index
    %0 = vector.load %arg1[%c0, %c0_0] : memref<32x3xf32, #tpu.memory_space<vmem>>, vector<32x3xf32>
    %c0_1 = arith.constant 0 : index
    %c0_2 = arith.constant 0 : index
    %1 = vector.load %arg2[%c0_1, %c0_2] : memref<3x128xf32, #tpu.memory_space<vmem>>, vector<3x128xf32>
    %2 = vector.extract_strided_slice %0 {offsets = [0, 0], sizes = [32, 1], strides = [1, 1]} : vector<32x3xf32> to vector<32x1xf32>
    %3 = vector.extract_strided_slice %1 {offsets = [0, 0], sizes = [1, 128], strides = [1, 1]} : vector<3x128xf32> to vector<1x128xf32>
    %4 = vector.broadcast %2 : vector<32x1xf32> to vector<32x128xf32>
    %5 = vector.broadcast %3 : vector<1x128xf32> to vector<32x128xf32>
    %6 = arith.subf %4, %5 : vector<32x128xf32>
    %7 = arith.mulf %6, %6 : vector<32x128xf32>
    %8 = vector.extract_strided_slice %0 {offsets = [0, 1], sizes = [32, 1], strides = [1, 1]} : vector<32x3xf32> to vector<32x1xf32>
    %9 = vector.extract_strided_slice %1 {offsets = [1, 0], sizes = [1, 128], strides = [1, 1]} : vector<3x128xf32> to vector<1x128xf32>
    %10 = vector.broadcast %8 : vector<32x1xf32> to vector<32x128xf32>
    %11 = vector.broadcast %9 : vector<1x128xf32> to vector<32x128xf32>
    %12 = arith.subf %10, %11 : vector<32x128xf32>
    %13 = arith.mulf %12, %12 : vector<32x128xf32>
    %14 = arith.addf %7, %13 : vector<32x128xf32>
    %15 = vector.extract_strided_slice %0 {offsets = [0, 2], sizes = [32, 1], strides = [1, 1]} : vector<32x3xf32> to vector<32x1xf32>
    %16 = vector.extract_strided_slice %1 {offsets = [2, 0], sizes = [1, 128], strides = [1, 1]} : vector<3x128xf32> to vector<1x128xf32>
    %17 = vector.broadcast %15 : vector<32x1xf32> to vector<32x128xf32>
    %18 = vector.broadcast %16 : vector<1x128xf32> to vector<32x128xf32>
    %19 = arith.subf %17, %18 : vector<32x128xf32>
    %20 = arith.mulf %19, %19 : vector<32x128xf32>
    %21 = arith.addf %14, %20 : vector<32x128xf32>
    %c0_3 = arith.constant 0 : index
    %c0_4 = arith.constant 0 : index
    %22 = vector.load %arg3[%c0_3, %c0_4] : memref<32x1xi32, #tpu.memory_space<vmem>>, vector<32x1xi32>
    %c0_5 = arith.constant 0 : index
    %c0_6 = arith.constant 0 : index
    %23 = vector.load %arg4[%c0_5, %c0_6] : memref<1x128xi32, #tpu.memory_space<vmem>>, vector<1x128xi32>
    %24 = vector.broadcast %22 : vector<32x1xi32> to vector<32x128xi32>
    %25 = vector.broadcast %23 : vector<1x128xi32> to vector<32x128xi32>
    %26 = arith.cmpi eq, %24, %25 : vector<32x128xi32>
    %cst = arith.constant 4.000000e+00 : f32
    %27 = vector.broadcast %cst : f32 to vector<32x128xf32>
    %28 = arith.cmpf ole, %21, %27 : vector<32x128xf32>
    %c32_i32 = arith.constant 32 : i32
    %29 = arith.muli %arg0, %c32_i32 : i32
    %30 = tpu.iota {dimensions = array<i32: 0>} : vector<32x1xi32>
    %31 = vector.broadcast %29 : i32 to vector<32x1xi32>
    %32 = arith.addi %31, %30 : vector<32x1xi32>
    %33 = tpu.iota {dimensions = array<i32: 1>} : vector<1x128xi32>
    %34 = arith.andi %26, %28 : vector<32x128xi1>
    %35 = vector.broadcast %32 : vector<32x1xi32> to vector<32x128xi32>
    %36 = vector.broadcast %33 : vector<1x128xi32> to vector<32x128xi32>
    %37 = arith.cmpi ne, %35, %36 : vector<32x128xi32>
    %38 = arith.andi %34, %37 : vector<32x128xi1>
    %39 = arith.sitofp %33 : vector<1x128xi32> to vector<1x128xf32>
    %cst_7 = arith.constant 1.280000e+02 : f32
    %40 = vector.shape_cast %39 : vector<1x128xf32> to vector<1x128xf32>
    %41 = vector.broadcast %40 : vector<1x128xf32> to vector<32x128xf32>
    %42 = vector.broadcast %cst_7 : f32 to vector<32x128xf32>
    %43 = arith.select %38, %41, %42 : vector<32x128xi1>, vector<32x128xf32>
    %cst_8 = arith.constant dense<0x7F800000> : vector<32xf32>
    %44 = vector.multi_reduction <minimumf>, %43, %cst_8 [1] : vector<32x128xf32> to vector<32xf32>
    %45 = vector.shape_cast %44 : vector<32xf32> to vector<32x1xf32>
    %cst_9 = arith.constant 1.280000e+02 : f32
    %46 = vector.broadcast %cst_9 : f32 to vector<32x1xf32>
    %47 = arith.cmpf olt, %45, %46 : vector<32x1xf32>
    %48 = vector.broadcast %45 : vector<32x1xf32> to vector<32x128xf32>
    %49 = arith.cmpf oeq, %43, %48 : vector<32x128xf32>
    %50 = vector.broadcast %47 : vector<32x1xi1> to vector<32x128xi1>
    %51 = arith.andi %49, %50 : vector<32x128xi1>
    %cst_10 = arith.constant 0.000000e+00 : f32
    %52 = vector.broadcast %cst_10 : f32 to vector<32x128xf32>
    %53 = arith.select %51, %21, %52 : vector<32x128xi1>, vector<32x128xf32>
    %cst_11 = arith.constant dense<0.000000e+00> : vector<32xf32>
    %54 = vector.multi_reduction <add>, %53, %cst_11 [1] : vector<32x128xf32> to vector<32xf32>
    %55 = vector.shape_cast %54 : vector<32xf32> to vector<32x1xf32>
    %cst_12 = arith.constant -1.000000e+00 : f32
    %56 = vector.broadcast %cst_12 : f32 to vector<32x1xf32>
    %57 = arith.select %47, %45, %56 : vector<32x1xi1>, vector<32x1xf32>
    %58 = arith.fptosi %57 : vector<32x1xf32> to vector<32x1xi32>
    %c0_13 = arith.constant 0 : index
    %c0_14 = arith.constant 0 : index
    %59 = vector.load %arg5[%c0_13, %c0_14] : memref<32x8xi32, #tpu.memory_space<vmem>>, vector<32x1xi32>
    tpu.vector_store %arg5[%c0_13, %c0_14], %58 {strides = array<i32>} : memref<32x8xi32, #tpu.memory_space<vmem>>, vector<32x1xi32>,
    %60 = math.sqrt %55 : vector<32x1xf32>
    %cst_15 = arith.constant 0.000000e+00 : f32
    %61 = vector.broadcast %cst_15 : f32 to vector<32x1xf32>
    %62 = arith.select %47, %60, %61 : vector<32x1xi1>, vector<32x1xf32>
    %c0_16 = arith.constant 0 : index
    %c0_17 = arith.constant 0 : index
    %63 = vector.load %arg6[%c0_16, %c0_17] : memref<32x8xf32, #tpu.memory_space<vmem>>, vector<32x1xf32>
    tpu.vector_store %arg6[%c0_16, %c0_17], %62 {strides = array<i32>} : memref<32x8xf32, #tpu.memory_space<vmem>>, vector<32x1xf32>,
    %cst_18 = arith.constant 1.280000e+02 : f32
    %64 = vector.broadcast %cst_18 : f32 to vector<32x128xf32>
    %65 = arith.select %51, %64, %43 : vector<32x128xi1>, vector<32x128xf32>
    %cst_19 = arith.constant dense<0x7F800000> : vector<32xf32>
    %66 = vector.multi_reduction <minimumf>, %65, %cst_19 [1] : vector<32x128xf32> to vector<32xf32>
    %67 = vector.shape_cast %66 : vector<32xf32> to vector<32x1xf32>
    %cst_20 = arith.constant 1.280000e+02 : f32
    %68 = vector.broadcast %cst_20 : f32 to vector<32x1xf32>
    %69 = arith.cmpf olt, %67, %68 : vector<32x1xf32>
    %70 = vector.broadcast %67 : vector<32x1xf32> to vector<32x128xf32>
    %71 = arith.cmpf oeq, %65, %70 : vector<32x128xf32>
    %72 = vector.broadcast %69 : vector<32x1xi1> to vector<32x128xi1>
    %73 = arith.andi %71, %72 : vector<32x128xi1>
    %cst_21 = arith.constant 0.000000e+00 : f32
    %74 = vector.broadcast %cst_21 : f32 to vector<32x128xf32>
    %75 = arith.select %73, %21, %74 : vector<32x128xi1>, vector<32x128xf32>
    %cst_22 = arith.constant dense<0.000000e+00> : vector<32xf32>
    %76 = vector.multi_reduction <add>, %75, %cst_22 [1] : vector<32x128xf32> to vector<32xf32>
    %77 = vector.shape_cast %76 : vector<32xf32> to vector<32x1xf32>
    %cst_23 = arith.constant -1.000000e+00 : f32
    %78 = vector.broadcast %cst_23 : f32 to vector<32x1xf32>
    %79 = arith.select %69, %67, %78 : vector<32x1xi1>, vector<32x1xf32>
    %80 = arith.fptosi %79 : vector<32x1xf32> to vector<32x1xi32>
    %c0_24 = arith.constant 0 : index
    %c1 = arith.constant 1 : index
    %81 = vector.load %arg5[%c0_24, %c1] : memref<32x8xi32, #tpu.memory_space<vmem>>, vector<32x1xi32>
    tpu.vector_store %arg5[%c0_24, %c1], %80 {strides = array<i32>} : memref<32x8xi32, #tpu.memory_space<vmem>>, vector<32x1xi32>,
    %82 = math.sqrt %77 : vector<32x1xf32>
    %cst_25 = arith.constant 0.000000e+00 : f32
    %83 = vector.broadcast %cst_25 : f32 to vector<32x1xf32>
    %84 = arith.select %69, %82, %83 : vector<32x1xi1>, vector<32x1xf32>
    %c0_26 = arith.constant 0 : index
    %c1_27 = arith.constant 1 : index
    %85 = vector.load %arg6[%c0_26, %c1_27] : memref<32x8xf32, #tpu.memory_space<vmem>>, vector<32x1xf32>
    tpu.vector_store %arg6[%c0_26, %c1_27], %84 {strides = array<i32>} : memref<32x8xf32, #tpu.memory_space<vmem>>, vector<32x1xf32>,
    %cst_28 = arith.constant 1.280000e+02 : f32
    %86 = vector.broadcast %cst_28 : f32 to vector<32x128xf32>
    %87 = arith.select %73, %86, %65 : vector<32x128xi1>, vector<32x128xf32>
    %cst_29 = arith.constant dense<0x7F800000> : vector<32xf32>
    %88 = vector.multi_reduction <minimumf>, %87, %cst_29 [1] : vector<32x128xf32> to vector<32xf32>
    %89 = vector.shape_cast %88 : vector<32xf32> to vector<32x1xf32>
    %cst_30 = arith.constant 1.280000e+02 : f32
    %90 = vector.broadcast %cst_30 : f32 to vector<32x1xf32>
    %91 = arith.cmpf olt, %89, %90 : vector<32x1xf32>
    %92 = vector.broadcast %89 : vector<32x1xf32> to vector<32x128xf32>
    %93 = arith.cmpf oeq, %87, %92 : vector<32x128xf32>
    %94 = vector.broadcast %91 : vector<32x1xi1> to vector<32x128xi1>
    %95 = arith.andi %93, %94 : vector<32x128xi1>
    %cst_31 = arith.constant 0.000000e+00 : f32
    %96 = vector.broadcast %cst_31 : f32 to vector<32x128xf32>
    %97 = arith.select %95, %21, %96 : vector<32x128xi1>, vector<32x128xf32>
    %cst_32 = arith.constant dense<0.000000e+00> : vector<32xf32>
    %98 = vector.multi_reduction <add>, %97, %cst_32 [1] : vector<32x128xf32> to vector<32xf32>
    %99 = vector.shape_cast %98 : vector<32xf32> to vector<32x1xf32>
    %cst_33 = arith.constant -1.000000e+00 : f32
    %100 = vector.broadcast %cst_33 : f32 to vector<32x1xf32>
    %101 = arith.select %91, %89, %100 : vector<32x1xi1>, vector<32x1xf32>
    %102 = arith.fptosi %101 : vector<32x1xf32> to vector<32x1xi32>
    %c0_34 = arith.constant 0 : index
    %c2 = arith.constant 2 : index
    %103 = vector.load %arg5[%c0_34, %c2] : memref<32x8xi32, #tpu.memory_space<vmem>>, vector<32x1xi32>
    tpu.vector_store %arg5[%c0_34, %c2], %102 {strides = array<i32>} : memref<32x8xi32, #tpu.memory_space<vmem>>, vector<32x1xi32>,
    %104 = math.sqrt %99 : vector<32x1xf32>
    %cst_35 = arith.constant 0.000000e+00 : f32
    %105 = vector.broadcast %cst_35 : f32 to vector<32x1xf32>
    %106 = arith.select %91, %104, %105 : vector<32x1xi1>, vector<32x1xf32>
    %c0_36 = arith.constant 0 : index
    %c2_37 = arith.constant 2 : index
    %107 = vector.load %arg6[%c0_36, %c2_37] : memref<32x8xf32, #tpu.memory_space<vmem>>, vector<32x1xf32>
    tpu.vector_store %arg6[%c0_36, %c2_37], %106 {strides = array<i32>} : memref<32x8xf32, #tpu.memory_space<vmem>>, vector<32x1xf32>,
    %cst_38 = arith.constant 1.280000e+02 : f32
    %108 = vector.broadcast %cst_38 : f32 to vector<32x128xf32>
    %109 = arith.select %95, %108, %87 : vector<32x128xi1>, vector<32x128xf32>
    %cst_39 = arith.constant dense<0x7F800000> : vector<32xf32>
    %110 = vector.multi_reduction <minimumf>, %109, %cst_39 [1] : vector<32x128xf32> to vector<32xf32>
    %111 = vector.shape_cast %110 : vector<32xf32> to vector<32x1xf32>
    %cst_40 = arith.constant 1.280000e+02 : f32
    %112 = vector.broadcast %cst_40 : f32 to vector<32x1xf32>
    %113 = arith.cmpf olt, %111, %112 : vector<32x1xf32>
    %114 = vector.broadcast %111 : vector<32x1xf32> to vector<32x128xf32>
    %115 = arith.cmpf oeq, %109, %114 : vector<32x128xf32>
    %116 = vector.broadcast %113 : vector<32x1xi1> to vector<32x128xi1>
    %117 = arith.andi %115, %116 : vector<32x128xi1>
    %cst_41 = arith.constant 0.000000e+00 : f32
    %118 = vector.broadcast %cst_41 : f32 to vector<32x128xf32>
    %119 = arith.select %117, %21, %118 : vector<32x128xi1>, vector<32x128xf32>
    %cst_42 = arith.constant dense<0.000000e+00> : vector<32xf32>
    %120 = vector.multi_reduction <add>, %119, %cst_42 [1] : vector<32x128xf32> to vector<32xf32>
    %121 = vector.shape_cast %120 : vector<32xf32> to vector<32x1xf32>
    %cst_43 = arith.constant -1.000000e+00 : f32
    %122 = vector.broadcast %cst_43 : f32 to vector<32x1xf32>
    %123 = arith.select %113, %111, %122 : vector<32x1xi1>, vector<32x1xf32>
    %124 = arith.fptosi %123 : vector<32x1xf32> to vector<32x1xi32>
    %c0_44 = arith.constant 0 : index
    %c3 = arith.constant 3 : index
    %125 = vector.load %arg5[%c0_44, %c3] : memref<32x8xi32, #tpu.memory_space<vmem>>, vector<32x1xi32>
    tpu.vector_store %arg5[%c0_44, %c3], %124 {strides = array<i32>} : memref<32x8xi32, #tpu.memory_space<vmem>>, vector<32x1xi32>,
    %126 = math.sqrt %121 : vector<32x1xf32>
    %cst_45 = arith.constant 0.000000e+00 : f32
    %127 = vector.broadcast %cst_45 : f32 to vector<32x1xf32>
    %128 = arith.select %113, %126, %127 : vector<32x1xi1>, vector<32x1xf32>
    %c0_46 = arith.constant 0 : index
    %c3_47 = arith.constant 3 : index
    %129 = vector.load %arg6[%c0_46, %c3_47] : memref<32x8xf32, #tpu.memory_space<vmem>>, vector<32x1xf32>
    tpu.vector_store %arg6[%c0_46, %c3_47], %128 {strides = array<i32>} : memref<32x8xf32, #tpu.memory_space<vmem>>, vector<32x1xf32>,
    %cst_48 = arith.constant 1.280000e+02 : f32
    %130 = vector.broadcast %cst_48 : f32 to vector<32x128xf32>
    %131 = arith.select %117, %130, %109 : vector<32x128xi1>, vector<32x128xf32>
    %cst_49 = arith.constant dense<0x7F800000> : vector<32xf32>
    %132 = vector.multi_reduction <minimumf>, %131, %cst_49 [1] : vector<32x128xf32> to vector<32xf32>
    %133 = vector.shape_cast %132 : vector<32xf32> to vector<32x1xf32>
    %cst_50 = arith.constant 1.280000e+02 : f32
    %134 = vector.broadcast %cst_50 : f32 to vector<32x1xf32>
    %135 = arith.cmpf olt, %133, %134 : vector<32x1xf32>
    %136 = vector.broadcast %133 : vector<32x1xf32> to vector<32x128xf32>
    %137 = arith.cmpf oeq, %131, %136 : vector<32x128xf32>
    %138 = vector.broadcast %135 : vector<32x1xi1> to vector<32x128xi1>
    %139 = arith.andi %137, %138 : vector<32x128xi1>
    %cst_51 = arith.constant 0.000000e+00 : f32
    %140 = vector.broadcast %cst_51 : f32 to vector<32x128xf32>
    %141 = arith.select %139, %21, %140 : vector<32x128xi1>, vector<32x128xf32>
    %cst_52 = arith.constant dense<0.000000e+00> : vector<32xf32>
    %142 = vector.multi_reduction <add>, %141, %cst_52 [1] : vector<32x128xf32> to vector<32xf32>
    %143 = vector.shape_cast %142 : vector<32xf32> to vector<32x1xf32>
    %cst_53 = arith.constant -1.000000e+00 : f32
    %144 = vector.broadcast %cst_53 : f32 to vector<32x1xf32>
    %145 = arith.select %135, %133, %144 : vector<32x1xi1>, vector<32x1xf32>
    %146 = arith.fptosi %145 : vector<32x1xf32> to vector<32x1xi32>
    %c0_54 = arith.constant 0 : index
    %c4 = arith.constant 4 : index
    %147 = vector.load %arg5[%c0_54, %c4] : memref<32x8xi32, #tpu.memory_space<vmem>>, vector<32x1xi32>
    tpu.vector_store %arg5[%c0_54, %c4], %146 {strides = array<i32>} : memref<32x8xi32, #tpu.memory_space<vmem>>, vector<32x1xi32>,
    %148 = math.sqrt %143 : vector<32x1xf32>
    %cst_55 = arith.constant 0.000000e+00 : f32
    %149 = vector.broadcast %cst_55 : f32 to vector<32x1xf32>
    %150 = arith.select %135, %148, %149 : vector<32x1xi1>, vector<32x1xf32>
    %c0_56 = arith.constant 0 : index
    %c4_57 = arith.constant 4 : index
    %151 = vector.load %arg6[%c0_56, %c4_57] : memref<32x8xf32, #tpu.memory_space<vmem>>, vector<32x1xf32>
    tpu.vector_store %arg6[%c0_56, %c4_57], %150 {strides = array<i32>} : memref<32x8xf32, #tpu.memory_space<vmem>>, vector<32x1xf32>,
    %cst_58 = arith.constant 1.280000e+02 : f32
    %152 = vector.broadcast %cst_58 : f32 to vector<32x128xf32>
    %153 = arith.select %139, %152, %131 : vector<32x128xi1>, vector<32x128xf32>
    %cst_59 = arith.constant dense<0x7F800000> : vector<32xf32>
    %154 = vector.multi_reduction <minimumf>, %153, %cst_59 [1] : vector<32x128xf32> to vector<32xf32>
    %155 = vector.shape_cast %154 : vector<32xf32> to vector<32x1xf32>
    %cst_60 = arith.constant 1.280000e+02 : f32
    %156 = vector.broadcast %cst_60 : f32 to vector<32x1xf32>
    %157 = arith.cmpf olt, %155, %156 : vector<32x1xf32>
    %158 = vector.broadcast %155 : vector<32x1xf32> to vector<32x128xf32>
    %159 = arith.cmpf oeq, %153, %158 : vector<32x128xf32>
    %160 = vector.broadcast %157 : vector<32x1xi1> to vector<32x128xi1>
    %161 = arith.andi %159, %160 : vector<32x128xi1>
    %cst_61 = arith.constant 0.000000e+00 : f32
    %162 = vector.broadcast %cst_61 : f32 to vector<32x128xf32>
    %163 = arith.select %161, %21, %162 : vector<32x128xi1>, vector<32x128xf32>
    %cst_62 = arith.constant dense<0.000000e+00> : vector<32xf32>
    %164 = vector.multi_reduction <add>, %163, %cst_62 [1] : vector<32x128xf32> to vector<32xf32>
    %165 = vector.shape_cast %164 : vector<32xf32> to vector<32x1xf32>
    %cst_63 = arith.constant -1.000000e+00 : f32
    %166 = vector.broadcast %cst_63 : f32 to vector<32x1xf32>
    %167 = arith.select %157, %155, %166 : vector<32x1xi1>, vector<32x1xf32>
    %168 = arith.fptosi %167 : vector<32x1xf32> to vector<32x1xi32>
    %c0_64 = arith.constant 0 : index
    %c5 = arith.constant 5 : index
    %169 = vector.load %arg5[%c0_64, %c5] : memref<32x8xi32, #tpu.memory_space<vmem>>, vector<32x1xi32>
    tpu.vector_store %arg5[%c0_64, %c5], %168 {strides = array<i32>} : memref<32x8xi32, #tpu.memory_space<vmem>>, vector<32x1xi32>,
    %170 = math.sqrt %165 : vector<32x1xf32>
    %cst_65 = arith.constant 0.000000e+00 : f32
    %171 = vector.broadcast %cst_65 : f32 to vector<32x1xf32>
    %172 = arith.select %157, %170, %171 : vector<32x1xi1>, vector<32x1xf32>
    %c0_66 = arith.constant 0 : index
    %c5_67 = arith.constant 5 : index
    %173 = vector.load %arg6[%c0_66, %c5_67] : memref<32x8xf32, #tpu.memory_space<vmem>>, vector<32x1xf32>
    tpu.vector_store %arg6[%c0_66, %c5_67], %172 {strides = array<i32>} : memref<32x8xf32, #tpu.memory_space<vmem>>, vector<32x1xf32>,
    %cst_68 = arith.constant 1.280000e+02 : f32
    %174 = vector.broadcast %cst_68 : f32 to vector<32x128xf32>
    %175 = arith.select %161, %174, %153 : vector<32x128xi1>, vector<32x128xf32>
    %cst_69 = arith.constant dense<0x7F800000> : vector<32xf32>
    %176 = vector.multi_reduction <minimumf>, %175, %cst_69 [1] : vector<32x128xf32> to vector<32xf32>
    %177 = vector.shape_cast %176 : vector<32xf32> to vector<32x1xf32>
    %cst_70 = arith.constant 1.280000e+02 : f32
    %178 = vector.broadcast %cst_70 : f32 to vector<32x1xf32>
    %179 = arith.cmpf olt, %177, %178 : vector<32x1xf32>
    %180 = vector.broadcast %177 : vector<32x1xf32> to vector<32x128xf32>
    %181 = arith.cmpf oeq, %175, %180 : vector<32x128xf32>
    %182 = vector.broadcast %179 : vector<32x1xi1> to vector<32x128xi1>
    %183 = arith.andi %181, %182 : vector<32x128xi1>
    %cst_71 = arith.constant 0.000000e+00 : f32
    %184 = vector.broadcast %cst_71 : f32 to vector<32x128xf32>
    %185 = arith.select %183, %21, %184 : vector<32x128xi1>, vector<32x128xf32>
    %cst_72 = arith.constant dense<0.000000e+00> : vector<32xf32>
    %186 = vector.multi_reduction <add>, %185, %cst_72 [1] : vector<32x128xf32> to vector<32xf32>
    %187 = vector.shape_cast %186 : vector<32xf32> to vector<32x1xf32>
    %cst_73 = arith.constant -1.000000e+00 : f32
    %188 = vector.broadcast %cst_73 : f32 to vector<32x1xf32>
    %189 = arith.select %179, %177, %188 : vector<32x1xi1>, vector<32x1xf32>
    %190 = arith.fptosi %189 : vector<32x1xf32> to vector<32x1xi32>
    %c0_74 = arith.constant 0 : index
    %c6 = arith.constant 6 : index
    %191 = vector.load %arg5[%c0_74, %c6] : memref<32x8xi32, #tpu.memory_space<vmem>>, vector<32x1xi32>
    tpu.vector_store %arg5[%c0_74, %c6], %190 {strides = array<i32>} : memref<32x8xi32, #tpu.memory_space<vmem>>, vector<32x1xi32>,
    %192 = math.sqrt %187 : vector<32x1xf32>
    %cst_75 = arith.constant 0.000000e+00 : f32
    %193 = vector.broadcast %cst_75 : f32 to vector<32x1xf32>
    %194 = arith.select %179, %192, %193 : vector<32x1xi1>, vector<32x1xf32>
    %c0_76 = arith.constant 0 : index
    %c6_77 = arith.constant 6 : index
    %195 = vector.load %arg6[%c0_76, %c6_77] : memref<32x8xf32, #tpu.memory_space<vmem>>, vector<32x1xf32>
    tpu.vector_store %arg6[%c0_76, %c6_77], %194 {strides = array<i32>} : memref<32x8xf32, #tpu.memory_space<vmem>>, vector<32x1xf32>,
    %cst_78 = arith.constant 1.280000e+02 : f32
    %196 = vector.broadcast %cst_78 : f32 to vector<32x128xf32>
    %197 = arith.select %183, %196, %175 : vector<32x128xi1>, vector<32x128xf32>
    %cst_79 = arith.constant dense<0x7F800000> : vector<32xf32>
    %198 = vector.multi_reduction <minimumf>, %197, %cst_79 [1] : vector<32x128xf32> to vector<32xf32>
    %199 = vector.shape_cast %198 : vector<32xf32> to vector<32x1xf32>
    %cst_80 = arith.constant 1.280000e+02 : f32
    %200 = vector.broadcast %cst_80 : f32 to vector<32x1xf32>
    %201 = arith.cmpf olt, %199, %200 : vector<32x1xf32>
    %202 = vector.broadcast %199 : vector<32x1xf32> to vector<32x128xf32>
    %203 = arith.cmpf oeq, %197, %202 : vector<32x128xf32>
    %204 = vector.broadcast %201 : vector<32x1xi1> to vector<32x128xi1>
    %205 = arith.andi %203, %204 : vector<32x128xi1>
    %cst_81 = arith.constant 0.000000e+00 : f32
    %206 = vector.broadcast %cst_81 : f32 to vector<32x128xf32>
    %207 = arith.select %205, %21, %206 : vector<32x128xi1>, vector<32x128xf32>
    %cst_82 = arith.constant dense<0.000000e+00> : vector<32xf32>
    %208 = vector.multi_reduction <add>, %207, %cst_82 [1] : vector<32x128xf32> to vector<32xf32>
    %209 = vector.shape_cast %208 : vector<32xf32> to vector<32x1xf32>
    %cst_83 = arith.constant -1.000000e+00 : f32
    %210 = vector.broadcast %cst_83 : f32 to vector<32x1xf32>
    %211 = arith.select %201, %199, %210 : vector<32x1xi1>, vector<32x1xf32>
    %212 = arith.fptosi %211 : vector<32x1xf32> to vector<32x1xi32>
    %c0_84 = arith.constant 0 : index
    %c7 = arith.constant 7 : index
    %213 = vector.load %arg5[%c0_84, %c7] : memref<32x8xi32, #tpu.memory_space<vmem>>, vector<32x1xi32>
    tpu.vector_store %arg5[%c0_84, %c7], %212 {strides = array<i32>} : memref<32x8xi32, #tpu.memory_space<vmem>>, vector<32x1xi32>,
    %214 = math.sqrt %209 : vector<32x1xf32>
    %cst_85 = arith.constant 0.000000e+00 : f32
    %215 = vector.broadcast %cst_85 : f32 to vector<32x1xf32>
    %216 = arith.select %201, %214, %215 : vector<32x1xi1>, vector<32x1xf32>
    %c0_86 = arith.constant 0 : index
    %c7_87 = arith.constant 7 : index
    %217 = vector.load %arg6[%c0_86, %c7_87] : memref<32x8xf32, #tpu.memory_space<vmem>>, vector<32x1xf32>
    tpu.vector_store %arg6[%c0_86, %c7_87], %216 {strides = array<i32>} : memref<32x8xf32, #tpu.memory_space<vmem>>, vector<32x1xf32>,
    return
  }
  func.func @transform_0(%arg0: i32) -> (i32, i32) {
    %c0_i32 = arith.constant 0 : i32
    %c0_i32_0 = arith.constant 0 : i32
    return %arg0, %c0_i32 : i32, i32
  }
  func.func @transform_1(%arg0: i32) -> (i32, i32) {
    %c0_i32 = arith.constant 0 : i32
    %c0_i32_0 = arith.constant 0 : i32
    %c0_i32_1 = arith.constant 0 : i32
    return %c0_i32, %c0_i32_0 : i32, i32
  }
  func.func @transform_2(%arg0: i32) -> (i32, i32) {
    %c0_i32 = arith.constant 0 : i32
    %c0_i32_0 = arith.constant 0 : i32
    return %arg0, %c0_i32 : i32, i32
  }
  func.func @transform_3(%arg0: i32) -> (i32, i32) {
    %c0_i32 = arith.constant 0 : i32
    %c0_i32_0 = arith.constant 0 : i32
    %c0_i32_1 = arith.constant 0 : i32
    return %c0_i32, %c0_i32_0 : i32, i32
  }
  func.func @transform_4(%arg0: i32) -> (i32, i32) {
    %c0_i32 = arith.constant 0 : i32
    %c0_i32_0 = arith.constant 0 : i32
    return %arg0, %c0_i32 : i32, i32
  }
  func.func @transform_5(%arg0: i32) -> (i32, i32) {
    %c0_i32 = arith.constant 0 : i32
    %c0_i32_0 = arith.constant 0 : i32
    return %arg0, %c0_i32 : i32, i32
  }
}

</mosaic_0001>

<llo_original>
// kernel: radius_interaction_graph.1
$region0: #{radius_interaction_graph.1}
  #allocation0 [shape = 'u32[]', space=smem, size = 0x4, offset = 0x4, fixed_abs, tag = 'smem constant byte address 0x4 - core index']
  #allocation1 [shape = 'u32[144,128]{1,0:T(1,128)}', space=vmem, size = 0x12000, scoped, tag = 'internal scratch']
  %s0 = inlined_call_operand.vmem [shape: f32[32,3], index: 0, kind: input, shape index: {}]
  %s1 = inlined_call_operand.vmem [shape: f32[3,128], index: 1, kind: input, shape index: {}]
  %s2 = inlined_call_operand.vmem [shape: s32[32,1], index: 2, kind: input, shape index: {}]
  %s3 = inlined_call_operand.vmem [shape: s32[1,128], index: 3, kind: input, shape index: {}]
  %s4 = inlined_call_operand.vmem [shape: s32[32,8], index: 4, kind: output, shape index: {0}]
  %s5 = inlined_call_operand.vmem [shape: f32[32,8], index: 5, kind: output, shape index: {1}]
  %6 = xla_tuple %s4, %s5
  %s7 = sld [smem:[#allocation0]]
  $region34: #{radius_interaction_graph.1} parent=0
    _
  %s9 = ssub.s32 1, %s7
  %s10 = scalar_select 0, %s9, %s7
  // Predicated region
  $region2: #{radius_interaction_graph.1} parent=0 // pred_check
    _
  $region3: #{radius_interaction_graph.1} parent=0 // pred_check_branch
    %12 = sbr.rel (0) target = $region5
  $region4: #{radius_interaction_graph.1} parent=0 // pred_region
    _
  $region5: #{radius_interaction_graph.1} parent=0 // pred_fallthru
    _
  // Predicated region
  $region6: #{radius_interaction_graph.1} parent=0 // pred_check
    _
  $region7: #{radius_interaction_graph.1} parent=0 // pred_check_branch
    %14 = sbr.rel (0) target = $region9
  $region8: #{radius_interaction_graph.1} parent=0 // pred_region
    _
  $region9: #{radius_interaction_graph.1} parent=0 // pred_fallthru
    _
  // Predicated region
  $region10: #{radius_interaction_graph.1} parent=0 // pred_check
    _
  $region11: #{radius_interaction_graph.1} parent=0 // pred_check_branch
    %16 = sbr.rel (0) target = $region13
  $region12: #{radius_interaction_graph.1} parent=0 // pred_region
    _
  $region13: #{radius_interaction_graph.1} parent=0 // pred_fallthru
    _
  // Predicated region
  $region14: #{radius_interaction_graph.1} parent=0 // pred_check
    _
  $region15: #{radius_interaction_graph.1} parent=0 // pred_check_branch
    %18 = sbr.rel (0) target = $region17
  $region16: #{radius_interaction_graph.1} parent=0 // pred_region
    _
  $region17: #{radius_interaction_graph.1} parent=0 // pred_fallthru
    _
  %v19 = vld [vmem:[%s0] sm:$0xff]
  %v20 = vld [vmem:[%s0 + $0x8] sm:$0xff]
  %v21 = vld [vmem:[%s0 + $0x10] sm:$0xff]
  %v22 = vld [vmem:[%s0 + $0x18] sm:$0xff]
  %v23 = vld [vmem:[%s1] sm:$0x7]
  %25 = vset.pattern.permute.xlu0 0
  %26 = vperm.xlu0 %25, %v19
  %v27 = vpop.permute.xlu0 %26
  %30 = vset.pattern.permute.xlu0 0
  %31 = vperm.xlu0 %30, %v20
  %v32 = vpop.permute.xlu0 %31
  %35 = vset.pattern.permute.xlu0 0
  %36 = vperm.xlu0 %35, %v21
  %v37 = vpop.permute.xlu0 %36
  %40 = vset.pattern.permute.xlu0 0
  %41 = vperm.xlu0 %40, %v22
  %v42 = vpop.permute.xlu0 %41
  %v44 = vlaneseq
  %v45 = vshrl.u32 %v44, 7
  %v46 = vsub.s32 0, %v45
  %v47 = vrot.slane %v23, %v46
  %v48 = vsub.f32 %v27, %v47
  %v49 = vsub.f32 %v32, %v47
  %v50 = vsub.f32 %v37, %v47
  %v51 = vsub.f32 %v42, %v47
  %v52 = vmul.f32 %v48, %v48
  %v53 = vmul.f32 %v49, %v49
  %v54 = vmul.f32 %v50, %v50
  %v55 = vmul.f32 %v51, %v51
  %56 = vset.pattern.permute.xlu0 1
  %57 = vperm.xlu0 %56, %v19
  %v58 = vpop.permute.xlu0 %57
  %60 = vset.pattern.permute.xlu0 1
  %61 = vperm.xlu0 %60, %v20
  %v62 = vpop.permute.xlu0 %61
  %64 = vset.pattern.permute.xlu0 1
  %65 = vperm.xlu0 %64, %v21
  %v66 = vpop.permute.xlu0 %65
  %68 = vset.pattern.permute.xlu0 1
  %69 = vperm.xlu0 %68, %v22
  %v70 = vpop.permute.xlu0 %69
  %v72 = vlaneseq
  %v73 = vshrl.u32 %v72, 7
  %v74 = vsub.s32 1, %v73
  %v75 = vrot.slane %v23, %v74
  %v76 = vsub.f32 %v58, %v75
  %v77 = vsub.f32 %v62, %v75
  %v78 = vsub.f32 %v66, %v75
  %v79 = vsub.f32 %v70, %v75
  %v80 = vmul.f32 %v76, %v76
  %v81 = vmul.f32 %v77, %v77
  %v82 = vmul.f32 %v78, %v78
  %v83 = vmul.f32 %v79, %v79
  %v84 = vadd.f32 %v52, %v80
  %v85 = vadd.f32 %v53, %v81
  %v86 = vadd.f32 %v54, %v82
  %v87 = vadd.f32 %v55, %v83
  %88 = vset.pattern.permute.xlu0 2
  %89 = vperm.xlu0 %88, %v19
  %v90 = vpop.permute.xlu0 %89
  %92 = vset.pattern.permute.xlu0 2
  %93 = vperm.xlu0 %92, %v20
  %v94 = vpop.permute.xlu0 %93
  %96 = vset.pattern.permute.xlu0 2
  %97 = vperm.xlu0 %96, %v21
  %v98 = vpop.permute.xlu0 %97
  %100 = vset.pattern.permute.xlu0 2
  %101 = vperm.xlu0 %100, %v22
  %v102 = vpop.permute.xlu0 %101
  %v104 = vlaneseq
  %v105 = vshrl.u32 %v104, 7
  %v106 = vsub.s32 2, %v105
  %v107 = vrot.slane %v23, %v106
  %v108 = vsub.f32 %v90, %v107
  %v109 = vsub.f32 %v94, %v107
  %v110 = vsub.f32 %v98, %v107
  %v111 = vsub.f32 %v102, %v107
  %v112 = vmul.f32 %v108, %v108
  %v113 = vmul.f32 %v109, %v109
  %v114 = vmul.f32 %v110, %v110
  %v115 = vmul.f32 %v111, %v111
  %v116 = vadd.f32 %v84, %v112
  %v117 = vadd.f32 %v85, %v113
  %v118 = vadd.f32 %v86, %v114
  %v119 = vadd.f32 %v87, %v115
  %v120 = vld [vmem:[%s2] sm:$0xff]
  %v121 = vld [vmem:[%s2 + $0x8] sm:$0xff]
  %v122 = vld [vmem:[%s2 + $0x10] sm:$0xff]
  %v123 = vld [vmem:[%s2 + $0x18] sm:$0xff]
  %v124 = vld [vmem:[%s3] sm:$0x1]
  %125 = vset.pattern.permute.xlu0 0
  %126 = vperm.xlu0 %125, %v120
  %v127 = vpop.permute.xlu0 %126
  %128 = vset.pattern.permute.xlu0 0
  %129 = vperm.xlu0 %128, %v121
  %v130 = vpop.permute.xlu0 %129
  %131 = vset.pattern.permute.xlu0 0
  %132 = vperm.xlu0 %131, %v122
  %v133 = vpop.permute.xlu0 %132
  %134 = vset.pattern.permute.xlu0 0
  %135 = vperm.xlu0 %134, %v123
  %v136 = vpop.permute.xlu0 %135
  %v137 = vlaneseq
  %v138 = vshrl.u32 %v137, 7
  %v139 = vsub.s32 0, %v138
  %v140 = vrot.slane %v124, %v139
  %vm141 = vcmp.eq.s32.totalorder %v127, %v140
  %vm142 = vcmp.eq.s32.totalorder %v130, %v140
  %vm143 = vcmp.eq.s32.totalorder %v133, %v140
  %vm144 = vcmp.eq.s32.totalorder %v136, %v140
  %vm145 = vcmp.le.f32.partialorder %v116, 4.0
  %vm146 = vcmp.le.f32.partialorder %v117, 4.0
  %vm147 = vcmp.le.f32.partialorder %v118, 4.0
  %vm148 = vcmp.le.f32.partialorder %v119, 4.0
  %s149 = smul.u32 0, 32
  %v150 = vlaneseq
  %v151 = vshrl.u32 %v150, 7
  %v152 = vadd.s32 %v151, 8
  %v153 = vadd.s32 %v151, 16
  %v154 = vadd.s32 %v151, 24
  %v155 = vstv %s149
  %v156 = vadd.s32 %v155, %v151
  %v157 = vadd.s32 %v155, %v152
  %v158 = vadd.s32 %v155, %v153
  %v159 = vadd.s32 %v155, %v154
  %v160 = vlaneseq
  %v161 = vand.u32 %v160, 127
  %vm162 = vmand %vm141, %vm145
  %vm163 = vmand %vm142, %vm146
  %vm164 = vmand %vm143, %vm147
  %vm165 = vmand %vm144, %vm148
  %vm166 = vcmp.ne.s32.totalorder %v156, %v161
  %vm167 = vcmp.ne.s32.totalorder %v157, %v161
  %vm168 = vcmp.ne.s32.totalorder %v158, %v161
  %vm169 = vcmp.ne.s32.totalorder %v159, %v161
  %vm170 = vmand %vm162, %vm166
  %vm171 = vmand %vm163, %vm167
  %vm172 = vmand %vm164, %vm168
  %vm173 = vmand %vm165, %vm169
  %v174 = vcvt.s32.f32 %v161
  %v175 = vsel %vm170, %v174, 128.0
  %v176 = vsel %vm171, %v174, 128.0
  %v177 = vsel %vm172, %v174, 128.0
  %v178 = vsel %vm173, %v174, 128.0
  %179 = vmin.xlane.f32.xlu0 %v175
  %v180 = vpop.xlane.xlu0 %179
  %181 = vmin.xlane.f32.xlu0 %v176
  %v182 = vpop.xlane.xlu0 %181
  %183 = vmin.xlane.f32.xlu0 %v177
  %v184 = vpop.xlane.xlu0 %183
  %185 = vmin.xlane.f32.xlu0 %v178
  %v186 = vpop.xlane.xlu0 %185
  %vm187 = vcmp.lt.f32.partialorder %v180, 128.0
  %vm188 = vcmp.lt.f32.partialorder %v182, 128.0
  %vm189 = vcmp.lt.f32.partialorder %v184, 128.0
  %vm190 = vcmp.lt.f32.partialorder %v186, 128.0
  %vm191 = vcmp.eq.f32.partialorder %v175, %v180
  %vm192 = vcmp.eq.f32.partialorder %v176, %v182
  %vm193 = vcmp.eq.f32.partialorder %v177, %v184
  %vm194 = vcmp.eq.f32.partialorder %v178, %v186
  %v195 = vsel %vm187, 1, 0
  %v196 = vsel %vm188, 1, 0
  %v197 = vsel %vm189, 1, 0
  %v198 = vsel %vm190, 1, 0
  %vm199 = vcmp.eq.s32.totalorder %v195, 1
  %vm200 = vcmp.eq.s32.totalorder %v196, 1
  %vm201 = vcmp.eq.s32.totalorder %v197, 1
  %vm202 = vcmp.eq.s32.totalorder %v198, 1
  %vm203 = vmand %vm191, %vm199
  %vm204 = vmand %vm192, %vm200
  %vm205 = vmand %vm193, %vm201
  %vm206 = vmand %vm194, %vm202
  %v207 = vsel %vm203, %v116, 0.0
  %v208 = vsel %vm204, %v117, 0.0
  %v209 = vsel %vm205, %v118, 0.0
  %v210 = vsel %vm206, %v119, 0.0
  %211 = vadd.xlane.f32.xlu0 %v207
  %v212 = vpop.xlane.xlu0 %211
  %213 = vadd.xlane.f32.xlu0 %v208
  %v214 = vpop.xlane.xlu0 %213
  %215 = vadd.xlane.f32.xlu0 %v209
  %v216 = vpop.xlane.xlu0 %215
  %217 = vadd.xlane.f32.xlu0 %v210
  %v218 = vpop.xlane.xlu0 %217
  %v219 = vsel %vm187, %v180, -1.0
  %v220 = vsel %vm188, %v182, -1.0
  %v221 = vsel %vm189, %v184, -1.0
  %v222 = vsel %vm190, %v186, -1.0
  %v223 = vcvt.f32.s32.to.zero.pseudo %v219
  %v224 = vcvt.f32.s32.to.zero.pseudo %v220
  %v225 = vcvt.f32.s32.to.zero.pseudo %v221
  %v226 = vcvt.f32.s32.to.zero.pseudo %v222
  %vm227 = vcmask 7168
  %228 = vst.msk [vmem:[%s4] sm:$0xff] %vm227, %v223
  %229 = vst.msk [vmem:[%s4 + $0x8] sm:$0xff] %vm227, %v224
  %230 = vst.msk [vmem:[%s4 + $0x10] sm:$0xff] %vm227, %v225
  %231 = vst.msk [vmem:[%s4 + $0x18] sm:$0xff] %vm227, %v226
  %v232 = vrsqrt.pop %v212
  %v233 = vmul.f32 %v212, %v232
  %vm234 = vcmp.eq.f32.partialorder %v212, inf
  %v235 = vsel %vm234, %v212, %v233
  %vm236 = vcmp.eq.f32.partialorder %v212, 0.0
  %v237 = vand.u32 %v212, 2147483648
  %v238 = vsel %vm236, %v237, %v235
  %v239 = vrsqrt.pop %v214
  %v240 = vmul.f32 %v214, %v239
  %vm241 = vcmp.eq.f32.partialorder %v214, inf
  %v242 = vsel %vm241, %v214, %v240
  %vm243 = vcmp.eq.f32.partialorder %v214, 0.0
  %v244 = vand.u32 %v214, 2147483648
  %v245 = vsel %vm243, %v244, %v242
  %v246 = vrsqrt.pop %v216
  %v247 = vmul.f32 %v216, %v246
  %vm248 = vcmp.eq.f32.partialorder %v216, inf
  %v249 = vsel %vm248, %v216, %v247
  %vm250 = vcmp.eq.f32.partialorder %v216, 0.0
  %v251 = vand.u32 %v216, 2147483648
  %v252 = vsel %vm250, %v251, %v249
  %v253 = vrsqrt.pop %v218
  %v254 = vmul.f32 %v218, %v253
  %vm255 = vcmp.eq.f32.partialorder %v218, inf
  %v256 = vsel %vm255, %v218, %v254
  %vm257 = vcmp.eq.f32.partialorder %v218, 0.0
  %v258 = vand.u32 %v218, 2147483648
  %v259 = vsel %vm257, %v258, %v256
  %v260 = vsel %vm187, %v238, 0.0
  %v261 = vsel %vm188, %v245, 0.0
  %v262 = vsel %vm189, %v252, 0.0
  %v263 = vsel %vm190, %v259, 0.0
  %264 = vst.msk [vmem:[%s5] sm:$0xff] %vm227, %v260
  %265 = vst.msk [vmem:[%s5 + $0x8] sm:$0xff] %vm227, %v261
  %266 = vst.msk [vmem:[%s5 + $0x10] sm:$0xff] %vm227, %v262
  %267 = vst.msk [vmem:[%s5 + $0x18] sm:$0xff] %vm227, %v263
  %v268 = vsel %vm203, 128.0, %v175
  %v269 = vsel %vm204, 128.0, %v176
  %v270 = vsel %vm205, 128.0, %v177
  %v271 = vsel %vm206, 128.0, %v178
  %272 = vmin.xlane.f32.xlu0 %v268
  %v273 = vpop.xlane.xlu0 %272
  %274 = vmin.xlane.f32.xlu0 %v269
  %v275 = vpop.xlane.xlu0 %274
  %276 = vmin.xlane.f32.xlu0 %v270
  %v277 = vpop.xlane.xlu0 %276
  %278 = vmin.xlane.f32.xlu0 %v271
  %v279 = vpop.xlane.xlu0 %278
  %vm280 = vcmp.lt.f32.partialorder %v273, 128.0
  %vm281 = vcmp.lt.f32.partialorder %v275, 128.0
  %vm282 = vcmp.lt.f32.partialorder %v277, 128.0
  %vm283 = vcmp.lt.f32.partialorder %v279, 128.0
  %vm284 = vcmp.eq.f32.partialorder %v268, %v273
  %vm285 = vcmp.eq.f32.partialorder %v269, %v275
  %vm286 = vcmp.eq.f32.partialorder %v270, %v277
  %vm287 = vcmp.eq.f32.partialorder %v271, %v279
  %v288 = vsel %vm280, 1, 0
  %v289 = vsel %vm281, 1, 0
  %v290 = vsel %vm282, 1, 0
  %v291 = vsel %vm283, 1, 0
  %vm292 = vcmp.eq.s32.totalorder %v288, 1
  %vm293 = vcmp.eq.s32.totalorder %v289, 1
  %vm294 = vcmp.eq.s32.totalorder %v290, 1
  %vm295 = vcmp.eq.s32.totalorder %v291, 1
  %vm296 = vmand %vm284, %vm292
  %vm297 = vmand %vm285, %vm293
  %vm298 = vmand %vm286, %vm294
  %vm299 = vmand %vm287, %vm295
  %v300 = vsel %vm296, %v116, 0.0
  %v301 = vsel %vm297, %v117, 0.0
  %v302 = vsel %vm298, %v118, 0.0
  %v303 = vsel %vm299, %v119, 0.0
  %304 = vadd.xlane.f32.xlu0 %v300
  %v305 = vpop.xlane.xlu0 %304
  %306 = vadd.xlane.f32.xlu0 %v301
  %v307 = vpop.xlane.xlu0 %306
  %308 = vadd.xlane.f32.xlu0 %v302
  %v309 = vpop.xlane.xlu0 %308
  %310 = vadd.xlane.f32.xlu0 %v303
  %v311 = vpop.xlane.xlu0 %310
  %v312 = vsel %vm280, %v273, -1.0
  %v313 = vsel %vm281, %v275, -1.0
  %v314 = vsel %vm282, %v277, -1.0
  %v315 = vsel %vm283, %v279, -1.0
  %v316 = vcvt.f32.s32.to.zero.pseudo %v312
  %v317 = vcvt.f32.s32.to.zero.pseudo %v313
  %v318 = vcvt.f32.s32.to.zero.pseudo %v314
  %v319 = vcvt.f32.s32.to.zero.pseudo %v315
  %vm320 = vcmask 15368
  %321 = vst.msk [vmem:[%s4] sm:$0xff] %vm320, %v316
  %322 = vst.msk [vmem:[%s4 + $0x8] sm:$0xff] %vm320, %v317
  %323 = vst.msk [vmem:[%s4 + $0x10] sm:$0xff] %vm320, %v318
  %324 = vst.msk [vmem:[%s4 + $0x18] sm:$0xff] %vm320, %v319
  %v325 = vrsqrt.pop %v305
  %v326 = vmul.f32 %v305, %v325
  %vm327 = vcmp.eq.f32.partialorder %v305, inf
  %v328 = vsel %vm327, %v305, %v326
  %vm329 = vcmp.eq.f32.partialorder %v305, 0.0
  %v330 = vand.u32 %v305, 2147483648
  %v331 = vsel %vm329, %v330, %v328
  %v332 = vrsqrt.pop %v307
  %v333 = vmul.f32 %v307, %v332
  %vm334 = vcmp.eq.f32.partialorder %v307, inf
  %v335 = vsel %vm334, %v307, %v333
  %vm336 = vcmp.eq.f32.partialorder %v307, 0.0
  %v337 = vand.u32 %v307, 2147483648
  %v338 = vsel %vm336, %v337, %v335
  %v339 = vrsqrt.pop %v309
  %v340 = vmul.f32 %v309, %v339
  %vm341 = vcmp.eq.f32.partialorder %v309, inf
  %v342 = vsel %vm341, %v309, %v340
  %vm343 = vcmp.eq.f32.partialorder %v309, 0.0
  %v344 = vand.u32 %v309, 2147483648
  %v345 = vsel %vm343, %v344, %v342
  %v346 = vrsqrt.pop %v311
  %v347 = vmul.f32 %v311, %v346
  %vm348 = vcmp.eq.f32.partialorder %v311, inf
  %v349 = vsel %vm348, %v311, %v347
  %vm350 = vcmp.eq.f32.partialorder %v311, 0.0
  %v351 = vand.u32 %v311, 2147483648
  %v352 = vsel %vm350, %v351, %v349
  %v353 = vsel %vm280, %v331, 0.0
  %v354 = vsel %vm281, %v338, 0.0
  %v355 = vsel %vm282, %v345, 0.0
  %v356 = vsel %vm283, %v352, 0.0
  %357 = vst.msk [vmem:[%s5] sm:$0xff] %vm320, %v353
  %358 = vst.msk [vmem:[%s5 + $0x8] sm:$0xff] %vm320, %v354
  %359 = vst.msk [vmem:[%s5 + $0x10] sm:$0xff] %vm320, %v355
  %360 = vst.msk [vmem:[%s5 + $0x18] sm:$0xff] %vm320, %v356
  %v361 = vsel %vm296, 128.0, %v268
  %v362 = vsel %vm297, 128.0, %v269
  %v363 = vsel %vm298, 128.0, %v270
  %v364 = vsel %vm299, 128.0, %v271
  %365 = vmin.xlane.f32.xlu0 %v361
  %v366 = vpop.xlane.xlu0 %365
  %367 = vmin.xlane.f32.xlu0 %v362
  %v368 = vpop.xlane.xlu0 %367
  %369 = vmin.xlane.f32.xlu0 %v363
  %v370 = vpop.xlane.xlu0 %369
  %371 = vmin.xlane.f32.xlu0 %v364
  %v372 = vpop.xlane.xlu0 %371
  %vm373 = vcmp.lt.f32.partialorder %v366, 128.0
  %vm374 = vcmp.lt.f32.partialorder %v368, 128.0
  %vm375 = vcmp.lt.f32.partialorder %v370, 128.0
  %vm376 = vcmp.lt.f32.partialorder %v372, 128.0
  %vm377 = vcmp.eq.f32.partialorder %v361, %v366
  %vm378 = vcmp.eq.f32.partialorder %v362, %v368
  %vm379 = vcmp.eq.f32.partialorder %v363, %v370
  %vm380 = vcmp.eq.f32.partialorder %v364, %v372
  %v381 = vsel %vm373, 1, 0
  %v382 = vsel %vm374, 1, 0
  %v383 = vsel %vm375, 1, 0
  %v384 = vsel %vm376, 1, 0
  %vm385 = vcmp.eq.s32.totalorder %v381, 1
  %vm386 = vcmp.eq.s32.totalorder %v382, 1
  %vm387 = vcmp.eq.s32.totalorder %v383, 1
  %vm388 = vcmp.eq.s32.totalorder %v384, 1
  %vm389 = vmand %vm377, %vm385
  %vm390 = vmand %vm378, %vm386
  %vm391 = vmand %vm379, %vm387
  %vm392 = vmand %vm380, %vm388
  %v393 = vsel %vm389, %v116, 0.0
  %v394 = vsel %vm390, %v117, 0.0
  %v395 = vsel %vm391, %v118, 0.0
  %v396 = vsel %vm392, %v119, 0.0
  %397 = vadd.xlane.f32.xlu0 %v393
  %v398 = vpop.xlane.xlu0 %397
  %399 = vadd.xlane.f32.xlu0 %v394
  %v400 = vpop.xlane.xlu0 %399
  %401 = vadd.xlane.f32.xlu0 %v395
  %v402 = vpop.xlane.xlu0 %401
  %403 = vadd.xlane.f32.xlu0 %v396
  %v404 = vpop.xlane.xlu0 %403
  %v405 = vsel %vm373, %v366, -1.0
  %v406 = vsel %vm374, %v368, -1.0
  %v407 = vsel %vm375, %v370, -1.0
  %v408 = vsel %vm376, %v372, -1.0
  %v409 = vcvt.f32.s32.to.zero.pseudo %v405
  %v410 = vcvt.f32.s32.to.zero.pseudo %v406
  %v411 = vcvt.f32.s32.to.zero.pseudo %v407
  %v412 = vcvt.f32.s32.to.zero.pseudo %v408
  %vm413 = vcmask 23568
  %414 = vst.msk [vmem:[%s4] sm:$0xff] %vm413, %v409
  %415 = vst.msk [vmem:[%s4 + $0x8] sm:$0xff] %vm413, %v410
  %416 = vst.msk [vmem:[%s4 + $0x10] sm:$0xff] %vm413, %v411
  %417 = vst.msk [vmem:[%s4 + $0x18] sm:$0xff] %vm413, %v412
  %v418 = vrsqrt.pop %v398
  %v419 = vmul.f32 %v398, %v418
  %vm420 = vcmp.eq.f32.partialorder %v398, inf
  %v421 = vsel %vm420, %v398, %v419
  %vm422 = vcmp.eq.f32.partialorder %v398, 0.0
  %v423 = vand.u32 %v398, 2147483648
  %v424 = vsel %vm422, %v423, %v421
  %v425 = vrsqrt.pop %v400
  %v426 = vmul.f32 %v400, %v425
  %vm427 = vcmp.eq.f32.partialorder %v400, inf
  %v428 = vsel %vm427, %v400, %v426
  %vm429 = vcmp.eq.f32.partialorder %v400, 0.0
  %v430 = vand.u32 %v400, 2147483648
  %v431 = vsel %vm429, %v430, %v428
  %v432 = vrsqrt.pop %v402
  %v433 = vmul.f32 %v402, %v432
  %vm434 = vcmp.eq.f32.partialorder %v402, inf
  %v435 = vsel %vm434, %v402, %v433
  %vm436 = vcmp.eq.f32.partialorder %v402, 0.0
  %v437 = vand.u32 %v402, 2147483648
  %v438 = vsel %vm436, %v437, %v435
  %v439 = vrsqrt.pop %v404
  %v440 = vmul.f32 %v404, %v439
  %vm441 = vcmp.eq.f32.partialorder %v404, inf
  %v442 = vsel %vm441, %v404, %v440
  %vm443 = vcmp.eq.f32.partialorder %v404, 0.0
  %v444 = vand.u32 %v404, 2147483648
  %v445 = vsel %vm443, %v444, %v442
  %v446 = vsel %vm373, %v424, 0.0
  %v447 = vsel %vm374, %v431, 0.0
  %v448 = vsel %vm375, %v438, 0.0
  %v449 = vsel %vm376, %v445, 0.0
  %450 = vst.msk [vmem:[%s5] sm:$0xff] %vm413, %v446
  %451 = vst.msk [vmem:[%s5 + $0x8] sm:$0xff] %vm413, %v447
  %452 = vst.msk [vmem:[%s5 + $0x10] sm:$0xff] %vm413, %v448
  %453 = vst.msk [vmem:[%s5 + $0x18] sm:$0xff] %vm413, %v449
  %v454 = vsel %vm389, 128.0, %v361
  %v455 = vsel %vm390, 128.0, %v362
  %v456 = vsel %vm391, 128.0, %v363
  %v457 = vsel %vm392, 128.0, %v364
  %458 = vmin.xlane.f32.xlu0 %v454
  %v459 = vpop.xlane.xlu0 %458
  %460 = vmin.xlane.f32.xlu0 %v455
  %v461 = vpop.xlane.xlu0 %460
  %462 = vmin.xlane.f32.xlu0 %v456
  %v463 = vpop.xlane.xlu0 %462
  %464 = vmin.xlane.f32.xlu0 %v457
  %v465 = vpop.xlane.xlu0 %464
  %vm466 = vcmp.lt.f32.partialorder %v459, 128.0
  %vm467 = vcmp.lt.f32.partialorder %v461, 128.0
  %vm468 = vcmp.lt.f32.partialorder %v463, 128.0
  %vm469 = vcmp.lt.f32.partialorder %v465, 128.0
  %vm470 = vcmp.eq.f32.partialorder %v454, %v459
  %vm471 = vcmp.eq.f32.partialorder %v455, %v461
  %vm472 = vcmp.eq.f32.partialorder %v456, %v463
  %vm473 = vcmp.eq.f32.partialorder %v457, %v465
  %v474 = vsel %vm466, 1, 0
  %v475 = vsel %vm467, 1, 0
  %v476 = vsel %vm468, 1, 0
  %v477 = vsel %vm469, 1, 0
  %vm478 = vcmp.eq.s32.totalorder %v474, 1
  %vm479 = vcmp.eq.s32.totalorder %v475, 1
  %vm480 = vcmp.eq.s32.totalorder %v476, 1
  %vm481 = vcmp.eq.s32.totalorder %v477, 1
  %vm482 = vmand %vm470, %vm478
  %vm483 = vmand %vm471, %vm479
  %vm484 = vmand %vm472, %vm480
  %vm485 = vmand %vm473, %vm481
  %v486 = vsel %vm482, %v116, 0.0
  %v487 = vsel %vm483, %v117, 0.0
  %v488 = vsel %vm484, %v118, 0.0
  %v489 = vsel %vm485, %v119, 0.0
  %490 = vadd.xlane.f32.xlu0 %v486
  %v491 = vpop.xlane.xlu0 %490
  %492 = vadd.xlane.f32.xlu0 %v487
  %v493 = vpop.xlane.xlu0 %492
  %494 = vadd.xlane.f32.xlu0 %v488
  %v495 = vpop.xlane.xlu0 %494
  %496 = vadd.xlane.f32.xlu0 %v489
  %v497 = vpop.xlane.xlu0 %496
  %v498 = vsel %vm466, %v459, -1.0
  %v499 = vsel %vm467, %v461, -1.0
  %v500 = vsel %vm468, %v463, -1.0
  %v501 = vsel %vm469, %v465, -1.0
  %v502 = vcvt.f32.s32.to.zero.pseudo %v498
  %v503 = vcvt.f32.s32.to.zero.pseudo %v499
  %v504 = vcvt.f32.s32.to.zero.pseudo %v500
  %v505 = vcvt.f32.s32.to.zero.pseudo %v501
  %vm506 = vcmask 31768
  %507 = vst.msk [vmem:[%s4] sm:$0xff] %vm506, %v502
  %508 = vst.msk [vmem:[%s4 + $0x8] sm:$0xff] %vm506, %v503
  %509 = vst.msk [vmem:[%s4 + $0x10] sm:$0xff] %vm506, %v504
  %510 = vst.msk [vmem:[%s4 + $0x18] sm:$0xff] %vm506, %v505
  %v511 = vrsqrt.pop %v491
  %v512 = vmul.f32 %v491, %v511
  %vm513 = vcmp.eq.f32.partialorder %v491, inf
  %v514 = vsel %vm513, %v491, %v512
  %vm515 = vcmp.eq.f32.partialorder %v491, 0.0
  %v516 = vand.u32 %v491, 2147483648
  %v517 = vsel %vm515, %v516, %v514
  %v518 = vrsqrt.pop %v493
  %v519 = vmul.f32 %v493, %v518
  %vm520 = vcmp.eq.f32.partialorder %v493, inf
  %v521 = vsel %vm520, %v493, %v519
  %vm522 = vcmp.eq.f32.partialorder %v493, 0.0
  %v523 = vand.u32 %v493, 2147483648
  %v524 = vsel %vm522, %v523, %v521
  %v525 = vrsqrt.pop %v495
  %v526 = vmul.f32 %v495, %v525
  %vm527 = vcmp.eq.f32.partialorder %v495, inf
  %v528 = vsel %vm527, %v495, %v526
  %vm529 = vcmp.eq.f32.partialorder %v495, 0.0
  %v530 = vand.u32 %v495, 2147483648
  %v531 = vsel %vm529, %v530, %v528
  %v532 = vrsqrt.pop %v497
  %v533 = vmul.f32 %v497, %v532
  %vm534 = vcmp.eq.f32.partialorder %v497, inf
  %v535 = vsel %vm534, %v497, %v533
  %vm536 = vcmp.eq.f32.partialorder %v497, 0.0
  %v537 = vand.u32 %v497, 2147483648
  %v538 = vsel %vm536, %v537, %v535
  %v539 = vsel %vm466, %v517, 0.0
  %v540 = vsel %vm467, %v524, 0.0
  %v541 = vsel %vm468, %v531, 0.0
  %v542 = vsel %vm469, %v538, 0.0
  %543 = vst.msk [vmem:[%s5] sm:$0xff] %vm506, %v539
  %544 = vst.msk [vmem:[%s5 + $0x8] sm:$0xff] %vm506, %v540
  %545 = vst.msk [vmem:[%s5 + $0x10] sm:$0xff] %vm506, %v541
  %546 = vst.msk [vmem:[%s5 + $0x18] sm:$0xff] %vm506, %v542
  %v547 = vsel %vm482, 128.0, %v454
  %v548 = vsel %vm483, 128.0, %v455
  %v549 = vsel %vm484, 128.0, %v456
  %v550 = vsel %vm485, 128.0, %v457
  %551 = vmin.xlane.f32.xlu0 %v547
  %v552 = vpop.xlane.xlu0 %551
  %553 = vmin.xlane.f32.xlu0 %v548
  %v554 = vpop.xlane.xlu0 %553
  %555 = vmin.xlane.f32.xlu0 %v549
  %v556 = vpop.xlane.xlu0 %555
  %557 = vmin.xlane.f32.xlu0 %v550
  %v558 = vpop.xlane.xlu0 %557
  %vm559 = vcmp.lt.f32.partialorder %v552, 128.0
  %vm560 = vcmp.lt.f32.partialorder %v554, 128.0
  %vm561 = vcmp.lt.f32.partialorder %v556, 128.0
  %vm562 = vcmp.lt.f32.partialorder %v558, 128.0
  %vm563 = vcmp.eq.f32.partialorder %v547, %v552
  %vm564 = vcmp.eq.f32.partialorder %v548, %v554
  %vm565 = vcmp.eq.f32.partialorder %v549, %v556
  %vm566 = vcmp.eq.f32.partialorder %v550, %v558
  %v567 = vsel %vm559, 1, 0
  %v568 = vsel %vm560, 1, 0
  %v569 = vsel %vm561, 1, 0
  %v570 = vsel %vm562, 1, 0
  %vm571 = vcmp.eq.s32.totalorder %v567, 1
  %vm572 = vcmp.eq.s32.totalorder %v568, 1
  %vm573 = vcmp.eq.s32.totalorder %v569, 1
  %vm574 = vcmp.eq.s32.totalorder %v570, 1
  %vm575 = vmand %vm563, %vm571
  %vm576 = vmand %vm564, %vm572
  %vm577 = vmand %vm565, %vm573
  %vm578 = vmand %vm566, %vm574
  %v579 = vsel %vm575, %v116, 0.0
  %v580 = vsel %vm576, %v117, 0.0
  %v581 = vsel %vm577, %v118, 0.0
  %v582 = vsel %vm578, %v119, 0.0
  %583 = vadd.xlane.f32.xlu0 %v579
  %v584 = vpop.xlane.xlu0 %583
  %585 = vadd.xlane.f32.xlu0 %v580
  %v586 = vpop.xlane.xlu0 %585
  %587 = vadd.xlane.f32.xlu0 %v581
  %v588 = vpop.xlane.xlu0 %587
  %589 = vadd.xlane.f32.xlu0 %v582
  %v590 = vpop.xlane.xlu0 %589
  %v591 = vsel %vm559, %v552, -1.0
  %v592 = vsel %vm560, %v554, -1.0
  %v593 = vsel %vm561, %v556, -1.0
  %v594 = vsel %vm562, %v558, -1.0
  %v595 = vcvt.f32.s32.to.zero.pseudo %v591
  %v596 = vcvt.f32.s32.to.zero.pseudo %v592
  %v597 = vcvt.f32.s32.to.zero.pseudo %v593
  %v598 = vcvt.f32.s32.to.zero.pseudo %v594
  %vm599 = vcmask 39968
  %600 = vst.msk [vmem:[%s4] sm:$0xff] %vm599, %v595
  %601 = vst.msk [vmem:[%s4 + $0x8] sm:$0xff] %vm599, %v596
  %602 = vst.msk [vmem:[%s4 + $0x10] sm:$0xff] %vm599, %v597
  %603 = vst.msk [vmem:[%s4 + $0x18] sm:$0xff] %vm599, %v598
  %v604 = vrsqrt.pop %v584
  %v605 = vmul.f32 %v584, %v604
  %vm606 = vcmp.eq.f32.partialorder %v584, inf
  %v607 = vsel %vm606, %v584, %v605
  %vm608 = vcmp.eq.f32.partialorder %v584, 0.0
  %v609 = vand.u32 %v584, 2147483648
  %v610 = vsel %vm608, %v609, %v607
  %v611 = vrsqrt.pop %v586
  %v612 = vmul.f32 %v586, %v611
  %vm613 = vcmp.eq.f32.partialorder %v586, inf
  %v614 = vsel %vm613, %v586, %v612
  %vm615 = vcmp.eq.f32.partialorder %v586, 0.0
  %v616 = vand.u32 %v586, 2147483648
  %v617 = vsel %vm615, %v616, %v614
  %v618 = vrsqrt.pop %v588
  %v619 = vmul.f32 %v588, %v618
  %vm620 = vcmp.eq.f32.partialorder %v588, inf
  %v621 = vsel %vm620, %v588, %v619
  %vm622 = vcmp.eq.f32.partialorder %v588, 0.0
  %v623 = vand.u32 %v588, 2147483648
  %v624 = vsel %vm622, %v623, %v621
  %v625 = vrsqrt.pop %v590
  %v626 = vmul.f32 %v590, %v625
  %vm627 = vcmp.eq.f32.partialorder %v590, inf
  %v628 = vsel %vm627, %v590, %v626
  %vm629 = vcmp.eq.f32.partialorder %v590, 0.0
  %v630 = vand.u32 %v590, 2147483648
  %v631 = vsel %vm629, %v630, %v628
  %v632 = vsel %vm559, %v610, 0.0
  %v633 = vsel %vm560, %v617, 0.0
  %v634 = vsel %vm561, %v624, 0.0
  %v635 = vsel %vm562, %v631, 0.0
  %636 = vst.msk [vmem:[%s5] sm:$0xff] %vm599, %v632
  %637 = vst.msk [vmem:[%s5 + $0x8] sm:$0xff] %vm599, %v633
  %638 = vst.msk [vmem:[%s5 + $0x10] sm:$0xff] %vm599, %v634
  %639 = vst.msk [vmem:[%s5 + $0x18] sm:$0xff] %vm599, %v635
  %v640 = vsel %vm575, 128.0, %v547
  %v641 = vsel %vm576, 128.0, %v548
  %v642 = vsel %vm577, 128.0, %v549
  %v643 = vsel %vm578, 128.0, %v550
  %644 = vmin.xlane.f32.xlu0 %v640
  %v645 = vpop.xlane.xlu0 %644
  %646 = vmin.xlane.f32.xlu0 %v641
  %v647 = vpop.xlane.xlu0 %646
  %648 = vmin.xlane.f32.xlu0 %v642
  %v649 = vpop.xlane.xlu0 %648
  %650 = vmin.xlane.f32.xlu0 %v643
  %v651 = vpop.xlane.xlu0 %650
  %vm652 = vcmp.lt.f32.partialorder %v645, 128.0
  %vm653 = vcmp.lt.f32.partialorder %v647, 128.0
  %vm654 = vcmp.lt.f32.partialorder %v649, 128.0
  %vm655 = vcmp.lt.f32.partialorder %v651, 128.0
  %vm656 = vcmp.eq.f32.partialorder %v640, %v645
  %vm657 = vcmp.eq.f32.partialorder %v641, %v647
  %vm658 = vcmp.eq.f32.partialorder %v642, %v649
  %vm659 = vcmp.eq.f32.partialorder %v643, %v651
  %v660 = vsel %vm652, 1, 0
  %v661 = vsel %vm653, 1, 0
  %v662 = vsel %vm654, 1, 0
  %v663 = vsel %vm655, 1, 0
  %vm664 = vcmp.eq.s32.totalorder %v660, 1
  %vm665 = vcmp.eq.s32.totalorder %v661, 1
  %vm666 = vcmp.eq.s32.totalorder %v662, 1
  %vm667 = vcmp.eq.s32.totalorder %v663, 1
  %vm668 = vmand %vm656, %vm664
  %vm669 = vmand %vm657, %vm665
  %vm670 = vmand %vm658, %vm666
  %vm671 = vmand %vm659, %vm667
  %v672 = vsel %vm668, %v116, 0.0
  %v673 = vsel %vm669, %v117, 0.0
  %v674 = vsel %vm670, %v118, 0.0
  %v675 = vsel %vm671, %v119, 0.0
  %676 = vadd.xlane.f32.xlu0 %v672
  %v677 = vpop.xlane.xlu0 %676
  %678 = vadd.xlane.f32.xlu0 %v673
  %v679 = vpop.xlane.xlu0 %678
  %680 = vadd.xlane.f32.xlu0 %v674
  %v681 = vpop.xlane.xlu0 %680
  %682 = vadd.xlane.f32.xlu0 %v675
  %v683 = vpop.xlane.xlu0 %682
  %v684 = vsel %vm652, %v645, -1.0
  %v685 = vsel %vm653, %v647, -1.0
  %v686 = vsel %vm654, %v649, -1.0
  %v687 = vsel %vm655, %v651, -1.0
  %v688 = vcvt.f32.s32.to.zero.pseudo %v684
  %v689 = vcvt.f32.s32.to.zero.pseudo %v685
  %v690 = vcvt.f32.s32.to.zero.pseudo %v686
  %v691 = vcvt.f32.s32.to.zero.pseudo %v687
  %vm692 = vcmask 48168
  %693 = vst.msk [vmem:[%s4] sm:$0xff] %vm692, %v688
  %694 = vst.msk [vmem:[%s4 + $0x8] sm:$0xff] %vm692, %v689
  %695 = vst.msk [vmem:[%s4 + $0x10] sm:$0xff] %vm692, %v690
  %696 = vst.msk [vmem:[%s4 + $0x18] sm:$0xff] %vm692, %v691
  %v697 = vrsqrt.pop %v677
  %v698 = vmul.f32 %v677, %v697
  %vm699 = vcmp.eq.f32.partialorder %v677, inf
  %v700 = vsel %vm699, %v677, %v698
  %vm701 = vcmp.eq.f32.partialorder %v677, 0.0
  %v702 = vand.u32 %v677, 2147483648
  %v703 = vsel %vm701, %v702, %v700
  %v704 = vrsqrt.pop %v679
  %v705 = vmul.f32 %v679, %v704
  %vm706 = vcmp.eq.f32.partialorder %v679, inf
  %v707 = vsel %vm706, %v679, %v705
  %vm708 = vcmp.eq.f32.partialorder %v679, 0.0
  %v709 = vand.u32 %v679, 2147483648
  %v710 = vsel %vm708, %v709, %v707
  %v711 = vrsqrt.pop %v681
  %v712 = vmul.f32 %v681, %v711
  %vm713 = vcmp.eq.f32.partialorder %v681, inf
  %v714 = vsel %vm713, %v681, %v712
  %vm715 = vcmp.eq.f32.partialorder %v681, 0.0
  %v716 = vand.u32 %v681, 2147483648
  %v717 = vsel %vm715, %v716, %v714
  %v718 = vrsqrt.pop %v683
  %v719 = vmul.f32 %v683, %v718
  %vm720 = vcmp.eq.f32.partialorder %v683, inf
  %v721 = vsel %vm720, %v683, %v719
  %vm722 = vcmp.eq.f32.partialorder %v683, 0.0
  %v723 = vand.u32 %v683, 2147483648
  %v724 = vsel %vm722, %v723, %v721
  %v725 = vsel %vm652, %v703, 0.0
  %v726 = vsel %vm653, %v710, 0.0
  %v727 = vsel %vm654, %v717, 0.0
  %v728 = vsel %vm655, %v724, 0.0
  %729 = vst.msk [vmem:[%s5] sm:$0xff] %vm692, %v725
  %730 = vst.msk [vmem:[%s5 + $0x8] sm:$0xff] %vm692, %v726
  %731 = vst.msk [vmem:[%s5 + $0x10] sm:$0xff] %vm692, %v727
  %732 = vst.msk [vmem:[%s5 + $0x18] sm:$0xff] %vm692, %v728
  %v733 = vsel %vm668, 128.0, %v640
  %v734 = vsel %vm669, 128.0, %v641
  %v735 = vsel %vm670, 128.0, %v642
  %v736 = vsel %vm671, 128.0, %v643
  %737 = vmin.xlane.f32.xlu0 %v733
  %v738 = vpop.xlane.xlu0 %737
  %739 = vmin.xlane.f32.xlu0 %v734
  %v740 = vpop.xlane.xlu0 %739
  %741 = vmin.xlane.f32.xlu0 %v735
  %v742 = vpop.xlane.xlu0 %741
  %743 = vmin.xlane.f32.xlu0 %v736
  %v744 = vpop.xlane.xlu0 %743
  %vm745 = vcmp.lt.f32.partialorder %v738, 128.0
  %vm746 = vcmp.lt.f32.partialorder %v740, 128.0
  %vm747 = vcmp.lt.f32.partialorder %v742, 128.0
  %vm748 = vcmp.lt.f32.partialorder %v744, 128.0
  %vm749 = vcmp.eq.f32.partialorder %v733, %v738
  %vm750 = vcmp.eq.f32.partialorder %v734, %v740
  %vm751 = vcmp.eq.f32.partialorder %v735, %v742
  %vm752 = vcmp.eq.f32.partialorder %v736, %v744
  %v753 = vsel %vm745, 1, 0
  %v754 = vsel %vm746, 1, 0
  %v755 = vsel %vm747, 1, 0
  %v756 = vsel %vm748, 1, 0
  %vm757 = vcmp.eq.s32.totalorder %v753, 1
  %vm758 = vcmp.eq.s32.totalorder %v754, 1
  %vm759 = vcmp.eq.s32.totalorder %v755, 1
  %vm760 = vcmp.eq.s32.totalorder %v756, 1
  %vm761 = vmand %vm749, %vm757
  %vm762 = vmand %vm750, %vm758
  %vm763 = vmand %vm751, %vm759
  %vm764 = vmand %vm752, %vm760
  %v765 = vsel %vm761, %v116, 0.0
  %v766 = vsel %vm762, %v117, 0.0
  %v767 = vsel %vm763, %v118, 0.0
  %v768 = vsel %vm764, %v119, 0.0
  %769 = vadd.xlane.f32.xlu0 %v765
  %v770 = vpop.xlane.xlu0 %769
  %771 = vadd.xlane.f32.xlu0 %v766
  %v772 = vpop.xlane.xlu0 %771
  %773 = vadd.xlane.f32.xlu0 %v767
  %v774 = vpop.xlane.xlu0 %773
  %775 = vadd.xlane.f32.xlu0 %v768
  %v776 = vpop.xlane.xlu0 %775
  %v777 = vsel %vm745, %v738, -1.0
  %v778 = vsel %vm746, %v740, -1.0
  %v779 = vsel %vm747, %v742, -1.0
  %v780 = vsel %vm748, %v744, -1.0
  %v781 = vcvt.f32.s32.to.zero.pseudo %v777
  %v782 = vcvt.f32.s32.to.zero.pseudo %v778
  %v783 = vcvt.f32.s32.to.zero.pseudo %v779
  %v784 = vcvt.f32.s32.to.zero.pseudo %v780
  %vm785 = vcmask 56368
  %786 = vst.msk [vmem:[%s4] sm:$0xff] %vm785, %v781
  %787 = vst.msk [vmem:[%s4 + $0x8] sm:$0xff] %vm785, %v782
  %788 = vst.msk [vmem:[%s4 + $0x10] sm:$0xff] %vm785, %v783
  %789 = vst.msk [vmem:[%s4 + $0x18] sm:$0xff] %vm785, %v784
  %v790 = vrsqrt.pop %v770
  %v791 = vmul.f32 %v770, %v790
  %vm792 = vcmp.eq.f32.partialorder %v770, inf
  %v793 = vsel %vm792, %v770, %v791
  %vm794 = vcmp.eq.f32.partialorder %v770, 0.0
  %v795 = vand.u32 %v770, 2147483648
  %v796 = vsel %vm794, %v795, %v793
  %v797 = vrsqrt.pop %v772
  %v798 = vmul.f32 %v772, %v797
  %vm799 = vcmp.eq.f32.partialorder %v772, inf
  %v800 = vsel %vm799, %v772, %v798
  %vm801 = vcmp.eq.f32.partialorder %v772, 0.0
  %v802 = vand.u32 %v772, 2147483648
  %v803 = vsel %vm801, %v802, %v800
  %v804 = vrsqrt.pop %v774
  %v805 = vmul.f32 %v774, %v804
  %vm806 = vcmp.eq.f32.partialorder %v774, inf
  %v807 = vsel %vm806, %v774, %v805
  %vm808 = vcmp.eq.f32.partialorder %v774, 0.0
  %v809 = vand.u32 %v774, 2147483648
  %v810 = vsel %vm808, %v809, %v807
  %v811 = vrsqrt.pop %v776
  %v812 = vmul.f32 %v776, %v811
  %vm813 = vcmp.eq.f32.partialorder %v776, inf
  %v814 = vsel %vm813, %v776, %v812
  %vm815 = vcmp.eq.f32.partialorder %v776, 0.0
  %v816 = vand.u32 %v776, 2147483648
  %v817 = vsel %vm815, %v816, %v814
  %v818 = vsel %vm745, %v796, 0.0
  %v819 = vsel %vm746, %v803, 0.0
  %v820 = vsel %vm747, %v810, 0.0
  %v821 = vsel %vm748, %v817, 0.0
  %822 = vst.msk [vmem:[%s5] sm:$0xff] %vm785, %v818
  %823 = vst.msk [vmem:[%s5 + $0x8] sm:$0xff] %vm785, %v819
  %824 = vst.msk [vmem:[%s5 + $0x10] sm:$0xff] %vm785, %v820
  %825 = vst.msk [vmem:[%s5 + $0x18] sm:$0xff] %vm785, %v821
  %v826 = vsel %vm761, 128.0, %v733
  %v827 = vsel %vm762, 128.0, %v734
  %v828 = vsel %vm763, 128.0, %v735
  %v829 = vsel %vm764, 128.0, %v736
  %830 = vmin.xlane.f32.xlu0 %v826
  %v831 = vpop.xlane.xlu0 %830
  %832 = vmin.xlane.f32.xlu0 %v827
  %v833 = vpop.xlane.xlu0 %832
  %834 = vmin.xlane.f32.xlu0 %v828
  %v835 = vpop.xlane.xlu0 %834
  %836 = vmin.xlane.f32.xlu0 %v829
  %v837 = vpop.xlane.xlu0 %836
  %vm838 = vcmp.lt.f32.partialorder %v831, 128.0
  %vm839 = vcmp.lt.f32.partialorder %v833, 128.0
  %vm840 = vcmp.lt.f32.partialorder %v835, 128.0
  %vm841 = vcmp.lt.f32.partialorder %v837, 128.0
  %vm842 = vcmp.eq.f32.partialorder %v826, %v831
  %vm843 = vcmp.eq.f32.partialorder %v827, %v833
  %vm844 = vcmp.eq.f32.partialorder %v828, %v835
  %vm845 = vcmp.eq.f32.partialorder %v829, %v837
  %v846 = vsel %vm838, 1, 0
  %v847 = vsel %vm839, 1, 0
  %v848 = vsel %vm840, 1, 0
  %v849 = vsel %vm841, 1, 0
  %vm850 = vcmp.eq.s32.totalorder %v846, 1
  %vm851 = vcmp.eq.s32.totalorder %v847, 1
  %vm852 = vcmp.eq.s32.totalorder %v848, 1
  %vm853 = vcmp.eq.s32.totalorder %v849, 1
  %vm854 = vmand %vm842, %vm850
  %vm855 = vmand %vm843, %vm851
  %vm856 = vmand %vm844, %vm852
  %vm857 = vmand %vm845, %vm853
  %v858 = vsel %vm854, %v116, 0.0
  %v859 = vsel %vm855, %v117, 0.0
  %v860 = vsel %vm856, %v118, 0.0
  %v861 = vsel %vm857, %v119, 0.0
  %862 = vadd.xlane.f32.xlu0 %v858
  %v863 = vpop.xlane.xlu0 %862
  %864 = vadd.xlane.f32.xlu0 %v859
  %v865 = vpop.xlane.xlu0 %864
  %866 = vadd.xlane.f32.xlu0 %v860
  %v867 = vpop.xlane.xlu0 %866
  %868 = vadd.xlane.f32.xlu0 %v861
  %v869 = vpop.xlane.xlu0 %868
  %v870 = vsel %vm838, %v831, -1.0
  %v871 = vsel %vm839, %v833, -1.0
  %v872 = vsel %vm840, %v835, -1.0
  %v873 = vsel %vm841, %v837, -1.0
  %v874 = vcvt.f32.s32.to.zero.pseudo %v870
  %v875 = vcvt.f32.s32.to.zero.pseudo %v871
  %v876 = vcvt.f32.s32.to.zero.pseudo %v872
  %v877 = vcvt.f32.s32.to.zero.pseudo %v873
  %vm878 = vcmask 64568
  %879 = vst.msk [vmem:[%s4] sm:$0xff] %vm878, %v874
  %880 = vst.msk [vmem:[%s4 + $0x8] sm:$0xff] %vm878, %v875
  %881 = vst.msk [vmem:[%s4 + $0x10] sm:$0xff] %vm878, %v876
  %882 = vst.msk [vmem:[%s4 + $0x18] sm:$0xff] %vm878, %v877
  %v883 = vrsqrt.pop %v863
  %v884 = vmul.f32 %v863, %v883
  %vm885 = vcmp.eq.f32.partialorder %v863, inf
  %v886 = vsel %vm885, %v863, %v884
  %vm887 = vcmp.eq.f32.partialorder %v863, 0.0
  %v888 = vand.u32 %v863, 2147483648
  %v889 = vsel %vm887, %v888, %v886
  %v890 = vrsqrt.pop %v865
  %v891 = vmul.f32 %v865, %v890
  %vm892 = vcmp.eq.f32.partialorder %v865, inf
  %v893 = vsel %vm892, %v865, %v891
  %vm894 = vcmp.eq.f32.partialorder %v865, 0.0
  %v895 = vand.u32 %v865, 2147483648
  %v896 = vsel %vm894, %v895, %v893
  %v897 = vrsqrt.pop %v867
  %v898 = vmul.f32 %v867, %v897
  %vm899 = vcmp.eq.f32.partialorder %v867, inf
  %v900 = vsel %vm899, %v867, %v898
  %vm901 = vcmp.eq.f32.partialorder %v867, 0.0
  %v902 = vand.u32 %v867, 2147483648
  %v903 = vsel %vm901, %v902, %v900
  %v904 = vrsqrt.pop %v869
  %v905 = vmul.f32 %v869, %v904
  %vm906 = vcmp.eq.f32.partialorder %v869, inf
  %v907 = vsel %vm906, %v869, %v905
  %vm908 = vcmp.eq.f32.partialorder %v869, 0.0
  %v909 = vand.u32 %v869, 2147483648
  %v910 = vsel %vm908, %v909, %v907
  %v911 = vsel %vm838, %v889, 0.0
  %v912 = vsel %vm839, %v896, 0.0
  %v913 = vsel %vm840, %v903, 0.0
  %v914 = vsel %vm841, %v910, 0.0
  %915 = vst.msk [vmem:[%s5] sm:$0xff] %vm878, %v911
  %916 = vst.msk [vmem:[%s5 + $0x8] sm:$0xff] %vm878, %v912
  %917 = vst.msk [vmem:[%s5 + $0x10] sm:$0xff] %vm878, %v913
  %918 = vst.msk [vmem:[%s5 + $0x18] sm:$0xff] %vm878, %v914
  // Predicated region
  $region18: #{radius_interaction_graph.1} parent=0 // pred_check
    _
  $region19: #{radius_interaction_graph.1} parent=0 // pred_check_branch
    %920 = sbr.rel (0) target = $region21
  $region20: #{radius_interaction_graph.1} parent=0 // pred_region
    _
  $region21: #{radius_interaction_graph.1} parent=0 // pred_fallthru
    _
  // Predicated region
  $region22: #{radius_interaction_graph.1} parent=0 // pred_check
    _
  $region23: #{radius_interaction_graph.1} parent=0 // pred_check_branch
    %922 = sbr.rel (0) target = $region25
  $region24: #{radius_interaction_graph.1} parent=0 // pred_region
    _
  $region25: #{radius_interaction_graph.1} parent=0 // pred_fallthru
    _
  // Predicated region
  $region26: #{radius_interaction_graph.1} parent=0 // pred_check
    _
  $region27: #{radius_interaction_graph.1} parent=0 // pred_check_branch
    %924 = sbr.rel (0) target = $region29
  $region28: #{radius_interaction_graph.1} parent=0 // pred_region
    _
  $region29: #{radius_interaction_graph.1} parent=0 // pred_fallthru
    _
  // Predicated region
  $region30: #{radius_interaction_graph.1} parent=0 // pred_check
    _
  $region31: #{radius_interaction_graph.1} parent=0 // pred_check_branch
    %926 = sbr.rel (0) target = $region33
  $region32: #{radius_interaction_graph.1} parent=0 // pred_region
    _
  $region33: #{radius_interaction_graph.1} parent=0 // pred_fallthru
    _

</llo_original>
